<compile_context>
chip_gen: v5e
topology: v5e:2x2
jax: 0.10.0
libtpu: 0.0.40
codegen_flags: <defaults>
</compile_context>

<pallas_src>
import jax
import jax.numpy as jnp
from jax.experimental import pallas as pl
from jax.experimental.pallas import tpu as pltpu


def _swish_kernel(x_ref, o_ref):
    x = x_ref[...]
    # Compute in f32 for accuracy on every generation; cast back to the
    # storage dtype.  Compute is fully hidden under DMA for this kernel.
    xf = x.astype(jnp.float32)
    o_ref[...] = (xf * jax.nn.sigmoid(xf)).astype(o_ref.dtype)


# Candidate lane widths (multiples of 128) for the flattened slab, widest first.
_LANE_CHOICES = (2048, 1024, 512, 256, 128)

# Sublane packing factor per storage itemsize: native (pack, 128) tiles.
_SUBLANE_PACK = {4: 8, 2: 16, 1: 32}

# Below this many bytes, pallas_call overhead dominates -> plain fused XLA.
_PALLAS_MIN_BYTES = 512 * 1024

# Per-block budgets, measured on the f32 *compute* footprint of one block.
_MAX_BLOCK_BYTES = 4 * 1024 * 1024   # 2 inputs+outputs x 2 bufs ~ 16 MiB: fits all gens
_MIN_BLOCK_BYTES = 256 * 1024        # keep per-step overhead amortized

# Aim for at least this many grid steps so v7x megacore can shard the grid
# across both TensorCores' DMA paths.
_MIN_GRID_STEPS = 4


def _round_up(a, b):
    return -(-a // b) * b


def swish(x, *, force_pallas=False, donate=False):
    """Elementwise x * sigmoid(x) (Swish / SiLU)."""
    orig_shape = x.shape
    dtype = x.dtype
    n = x.size
    itemsize = jnp.dtype(dtype).itemsize

    # Pick the widest lane-dense last dim (multiple of 128) that divides n.
    lane = None
    for cand in _LANE_CHOICES:
        if n > 0 and n % cand == 0:
            lane = cand
            break

    small = n * itemsize < _PALLAS_MIN_BYTES
    if lane is None or (small and not force_pallas):
        # Ragged (n % 128 != 0) or tiny inputs: a single fused XLA elementwise
        # pass is already at the HBM roofline and avoids the extra full
        # read+write passes a pad/slice wrapper around pallas_call would add.
        return x * jax.nn.sigmoid(x)

    rows = n // lane
    x2d = jnp.reshape(x, (rows, lane))

    # Sublane packing factor for this dtype (8 f32, 16 bf16, 32 int8/fp8).
    pack = _SUBLANE_PACK.get(itemsize, 8)

    # Block row budgets from the f32 compute footprint (kernel upcasts to f32).
    comp_itemsize = 4
    max_rows = max(pack, (_MAX_BLOCK_BYTES // (lane * comp_itemsize)) // pack * pack)
    min_rows = max(pack, (_MIN_BLOCK_BYTES // (lane * comp_itemsize)) // pack * pack)
    min_rows = min(min_rows, max_rows)

    # Target >= _MIN_GRID_STEPS grid steps (v7x megacore) within [min, max] rows.
    rows_per_step = _round_up(pl.cdiv(rows, _MIN_GRID_STEPS), pack)
    tile_rows = max(min(rows_per_step, max_rows), min_rows)
    if tile_rows >= rows:
        tile_rows = rows               # single full-extent block (always legal)
    grid = (pl.cdiv(rows, tile_rows),)  # ragged last block masked by Pallas

    cost = pl.CostEstimate(
        flops=4 * n,
        transcendentals=n,
        bytes_accessed=2 * n * itemsize,
    )

    out = pl.pallas_call(
        _swish_kernel,
        out_shape=jax.ShapeDtypeStruct((rows, lane), dtype),
        grid_spec=pltpu.PrefetchScalarGridSpec(
            num_scalar_prefetch=0,
            grid=grid,
            in_specs=[pl.BlockSpec((tile_rows, lane), lambda i: (i, 0))],
            out_specs=pl.BlockSpec((tile_rows, lane), lambda i: (i, 0)),
        ),
        compiler_params=pltpu.CompilerParams(
            dimension_semantics=("parallel",),
            vmem_limit_bytes=32 * 1024 * 1024,
        ),
        cost_estimate=cost,
        input_output_aliases={0: 0} if donate else {},
    )(x2d)

    return jnp.reshape(out, orig_shape)


if __name__ == "__main__":
    k0, k1, k2 = jax.random.split(jax.random.PRNGKey(0), 3)

    # Primary small example consistent with the PyTorch module (NCHW-style).
    x_small = jax.random.normal(k0, (2, 4, 16, 16), dtype=jnp.float32)

    # 1) Public API on the tiny input (fused-XLA small-input fast path).
    y_small = jax.block_until_ready(swish(x_small))
    ref_small = x_small * jax.nn.sigmoid(x_small)
    assert y_small.shape == x_small.shape and y_small.dtype == x_small.dtype
    assert jnp.allclose(y_small, ref_small, atol=1e-6, rtol=1e-6)

    # 2) Force the Pallas kernel on the same small input (single full block).
    y_small_k = jax.block_until_ready(swish(x_small, force_pallas=True))
    assert jnp.allclose(y_small_k, ref_small, atol=1e-6, rtol=1e-6)

    # 3) Larger aligned f32 input -> multi-step grid through the Pallas kernel.
    x_big = jax.random.normal(k1, (8, 8, 64, 128), dtype=jnp.float32)
    y_big = jax.block_until_ready(swish(x_big))
    ref_big = x_big * jax.nn.sigmoid(x_big)
    assert y_big.shape == x_big.shape and y_big.dtype == x_big.dtype
    assert jnp.allclose(y_big, ref_big, atol=1e-6, rtol=1e-6)

    # 4) bf16 input exercises the (16, 128) packing-aware tiling.
    x_bf = jax.random.normal(k2, (4, 8, 128, 128), dtype=jnp.bfloat16)
    y_bf = jax.block_until_ready(swish(x_bf))
    xf = x_bf.astype(jnp.float32)
    ref_bf = (xf * jax.nn.sigmoid(xf)).astype(jnp.bfloat16)
    assert y_bf.shape == x_bf.shape and y_bf.dtype == jnp.bfloat16
    assert jnp.allclose(
        y_bf.astype(jnp.float32), ref_bf.astype(jnp.float32), atol=1e-2, rtol=1e-2
    )

    print("KERNEL_OK")
</pallas_src>

<mosaic_0001>
module attributes {stable_mosaic.version = 11 : i64} {
  func.func @_swish_kernel(%arg0: i32, %arg1: memref<1x2048xf32, #tpu.memory_space<vmem>>, %arg2: memref<1x2048xf32, #tpu.memory_space<vmem>>) attributes {dimension_semantics = [#tpu.dimension_semantics<parallel>], iteration_bounds = array<i64: 1>, scalar_prefetch = 0 : i64, scratch_operands = 0 : i64, tpu.core_type = #tpu.core_type<tc>, window_params = [{transform_indices = @transform_0, window_bounds = array<i64: 1, 2048>}, {transform_indices = @transform_1, window_bounds = array<i64: 1, 2048>}]} {
    %c0 = arith.constant 0 : index
    %c0_0 = arith.constant 0 : index
    %0 = vector.load %arg1[%c0, %c0_0] : memref<1x2048xf32, #tpu.memory_space<vmem>>, vector<1x2048xf32>
    %1 = arith.negf %0 : vector<1x2048xf32>
    %2 = math.exp %1 : vector<1x2048xf32>
    %cst = arith.constant 1.000000e+00 : f32
    %3 = vector.broadcast %cst : f32 to vector<1x2048xf32>
    %4 = arith.addf %3, %2 : vector<1x2048xf32>
    %5 = arith.divf %3, %4 : vector<1x2048xf32>
    %6 = arith.mulf %0, %5 : vector<1x2048xf32>
    %c0_1 = arith.constant 0 : index
    %c0_2 = arith.constant 0 : index
    %7 = vector.load %arg2[%c0_1, %c0_2] : memref<1x2048xf32, #tpu.memory_space<vmem>>, vector<1x2048xf32>
    tpu.vector_store %arg2[%c0_1, %c0_2], %6 {strides = array<i32>} : memref<1x2048xf32, #tpu.memory_space<vmem>>, vector<1x2048xf32>,
    return
  }
  func.func @transform_0(%arg0: i32) -> (i32, i32) {
    %c0_i32 = arith.constant 0 : i32
    %c0_i32_0 = arith.constant 0 : i32
    return %arg0, %c0_i32 : i32, i32
  }
  func.func @transform_1(%arg0: i32) -> (i32, i32) {
    %c0_i32 = arith.constant 0 : i32
    %c0_i32_0 = arith.constant 0 : i32
    return %arg0, %c0_i32 : i32, i32
  }
}

</mosaic_0001>

<llo_original>
// kernel: tpu_custom_call.1
$region0: #{tpu_custom_call.1}
  #allocation0 [shape = 'u32[]', space=smem, size = 0x4, offset = 0x4, fixed_abs, tag = 'smem constant byte address 0x4 - core index']
  #allocation1 [shape = 'u32[72,128]{1,0:T(1,128)}', space=vmem, size = 0x9000, scoped, tag = 'internal scratch']
  %s0 = inlined_call_operand.hbm [shape: f32[1,2048], index: 0, kind: input, shape index: {}]
  %s1 = inlined_call_operand.hbm [shape: f32[1,2048], index: 1, kind: output, shape index: {}]
  %s2 = sld [smem:[#allocation0]]
  $region18: #{tpu_custom_call.1} parent=0
    _
  %s4 = ssub.s32 1, %s2
  %s5 = scalar_select 0, %s4, %s2
  $region1: #{tpu_custom_call.1} parent=0
    #allocation2 [shape = 'u8[8192]{0}', space=vmem, size = 0x2000, scoped, tag = 'input window, operand 0, single buffered']
    #allocation3 [shape = 's32[1]{0}', space=sflag, size = 0x4, scoped, tag = 'scoped memory for tpu_custom_call.1']
    #allocation4 [shape = 's32[1]{0}', space=sflag, size = 0x4, scoped, tag = 'scoped memory for tpu_custom_call.1']
    #allocation5 [shape = 'u8[8192]{0}', space=vmem, size = 0x2000, scoped, tag = 'output window, operand 0, single buffered']
    %6 = vsyncpa [#allocation3], 0
    %7 = vsyncpa [#allocation4], 0
    // Predicated region
    $region2: #{tpu_custom_call.1} parent=1 // pred_check
      _
    $region3: #{tpu_custom_call.1} parent=1 // pred_check_branch
      %9 = sbr.rel (0) target = $region5
    $region4: #{tpu_custom_call.1} parent=1 // pred_region
      %11 = vsyncadd [#allocation3], 0
      %s13 = sshll.u32 %s0, 4
      %s14 = int_to_ptr.hbm [resolvable:$true] %s13
      %s15 = sshll.u32 [#allocation2], 4
      %s16 = int_to_ptr.vmem [resolvable:$true] %s15
      %18 = dma.hbm_to_vmem [thread:$0]  %s14, 256, %s16, [#allocation3]
    $region5: #{tpu_custom_call.1} parent=1 // pred_fallthru
      _
    // Predicated region
    $region6: #{tpu_custom_call.1} parent=1 // pred_check
      _
    $region7: #{tpu_custom_call.1} parent=1 // pred_check_branch
      %20 = sbr.rel (0) target = $region9
    $region8: #{tpu_custom_call.1} parent=1 // pred_region
      %22 = dma.done [#allocation3], 256
    $region9: #{tpu_custom_call.1} parent=1 // pred_fallthru
      _
    %v23 = vld [vmem:[#allocation2] sm:$0xff]
    %v24 = vld [vmem:[#allocation2 + $0x8] sm:$0xff]
    %v25 = vxor.u32 %v23, 2147483648
    %v26 = vxor.u32 %v24, 2147483648
    %v27 = vmul.f32 %v25, 1.442695
    %v28 = vpow.pop %v27
    %v29 = vmul.f32 %v26, 1.442695
    %v30 = vpow.pop %v29
    %v31 = vadd.f32 %v28, 1.0
    %v32 = vadd.f32 %v30, 1.0
    %v33 = vrcp.pop %v31
    %v34 = vmul.f32 %v31, %v33
    %v35 = vsub.f32 1.0, %v34
    %v36 = vmul.f32 %v33, %v35
    %v37 = vadd.f32 %v33, %v36
    %vm38 = vweird.f32 %v31
    %vm39 = vweird.f32 %v33
    %vm40 = vmor %vm38, %vm39
    %v41 = vsel %vm40, %v33, %v37
    %v42 = vand.u32 2147483647, %v31
    %vm43 = vcmp.eq.f32.partialorder %v42, 8.507059e+37
    %v44 = vand.u32 %v31, 2147483648
    %v45 = vor.u32 1.1754944e-38, %v44
    %v46 = vsel %vm43, %v45, %v41
    %v47 = vmul.f32 1.0, %v46
    %v48 = vrcp.pop %v32
    %v49 = vmul.f32 %v32, %v48
    %v50 = vsub.f32 1.0, %v49
    %v51 = vmul.f32 %v48, %v50
    %v52 = vadd.f32 %v48, %v51
    %vm53 = vweird.f32 %v32
    %vm54 = vweird.f32 %v48
    %vm55 = vmor %vm53, %vm54
    %v56 = vsel %vm55, %v48, %v52
    %v57 = vand.u32 2147483647, %v32
    %vm58 = vcmp.eq.f32.partialorder %v57, 8.507059e+37
    %v59 = vand.u32 %v32, 2147483648
    %v60 = vor.u32 1.1754944e-38, %v59
    %v61 = vsel %vm58, %v60, %v56
    %v62 = vmul.f32 1.0, %v61
    %v63 = vmul.f32 %v23, %v47
    %v64 = vmul.f32 %v24, %v62
    %65 = vst [vmem:[#allocation5] sm:$0xff] %v63
    %66 = vst [vmem:[#allocation5 + $0x8] sm:$0xff] %v64
    // Predicated region
    $region10: #{tpu_custom_call.1} parent=1 // pred_check
      _
    $region11: #{tpu_custom_call.1} parent=1 // pred_check_branch
      %68 = sbr.rel (0) target = $region13
    $region12: #{tpu_custom_call.1} parent=1 // pred_region
      %70 = vsyncadd [#allocation4], 0
      %s72 = sshll.u32 [#allocation5], 4
      %s73 = int_to_ptr.vmem [resolvable:$true] %s72
      %s74 = sshll.u32 %s1, 4
      %s75 = int_to_ptr.hbm [resolvable:$true] %s74
      %77 = dma.vmem_to_hbm [thread:$0]  %s73, 256, %s75, [#allocation4]
    $region13: #{tpu_custom_call.1} parent=1 // pred_fallthru
      _
    // Predicated region
    $region14: #{tpu_custom_call.1} parent=1 // pred_check
      _
    $region15: #{tpu_custom_call.1} parent=1 // pred_check_branch
      %79 = sbr.rel (0) target = $region17
    $region16: #{tpu_custom_call.1} parent=1 // pred_region
      %81 = dma.done [#allocation4], 256
    $region17: #{tpu_custom_call.1} parent=1 // pred_fallthru
      _
    %82 = vsyncpa [#allocation3], 1
    %83 = vsyncpa [#allocation4], 1

</llo_original>
